<compile_context>
chip_gen: v7x
topology: tpu7x:2x2x1
jax: 0.10.0
libtpu: 0.0.40
codegen_flags: <defaults>
</compile_context>

<pallas_src>
import functools

import jax
import jax.numpy as jnp
from jax.experimental import pallas as pl
from jax.experimental.pallas import tpu as pltpu

BN_EPS = 1e-5


def _conv_relu_stats_kernel(xcols_ref, w_ref, gamma_ref, beta_ref,
                            y_ref, a_ref, b_ref,
                            sum_ref, ssum_ref, *, m_true):
    """Pass 1: conv (single MXU matmul) + fused ReLU + BN-stat accumulation.

    xcols_ref: (tile_m, K*Cin)  bf16 im2col'd input tile
    w_ref:     (K*Cin, tile_c)  bf16 conv weight tile
    gamma_ref: (1, tile_c)      f32 BN scale
    beta_ref:  (1, tile_c)      f32 BN shift
    y_ref:     (tile_m, tile_c) f32 conv+ReLU output tile (to HBM)
    a_ref:     (1, tile_c)      f32 folded BN scale   (written at last M step)
    b_ref:     (1, tile_c)      f32 folded BN shift   (written at last M step)
    sum_ref / ssum_ref: (1, tile_c) f32 scratch accumulators
    """
    mi = pl.program_id(1)

    @pl.when(mi == 0)
    def _():
        sum_ref[...] = jnp.zeros_like(sum_ref)
        ssum_ref[...] = jnp.zeros_like(ssum_ref)

    # Conv1d as one MXU matmul (bf16 operands, f32 accumulation), fused ReLU.
    y = jnp.dot(xcols_ref[...], w_ref[...], preferred_element_type=jnp.float32)
    y = jnp.maximum(y, 0.0)
    y_ref[...] = y

    # Single traversal for both moments (zero-padded rows contribute zero).
    sum_ref[...] += jnp.sum(y, axis=0, keepdims=True)
    ssum_ref[...] += jnp.sum(y * y, axis=0, keepdims=True)

    @pl.when(mi == pl.num_programs(1) - 1)
    def _():
        inv_m = 1.0 / m_true
        mean = sum_ref[...] * inv_m
        var = jnp.maximum(ssum_ref[...] * inv_m - mean * mean, 0.0)  # biased
        a = gamma_ref[...] * jax.lax.rsqrt(var + BN_EPS)
        a_ref[...] = a
        b_ref[...] = beta_ref[...] - mean * a


def _bn_apply_kernel(y_ref, a_ref, b_ref, o_ref):
    """Pass 2: apply folded BN scale/shift — purely elementwise, mem-bound."""
    o_ref[...] = (y_ref[...] * a_ref[...] + b_ref[...]).astype(o_ref.dtype)


@functools.partial(jax.jit, static_argnames=("stride", "padding", "dilation"))
def conv1d_relu_bn(x_ncl, weight, gamma, beta, *, stride=1, padding=0,
                   dilation=1):
    """x_ncl: (N, Cin, L); weight: (Cout, Cin, K); returns (N, Cout, Lout)."""
    n, cin, length = x_ncl.shape
    cout, _, k = weight.shape

    # NCL -> NLC (channels on the lane axis); bf16 halves im2col HBM traffic.
    x_nlc = jnp.transpose(x_ncl, (0, 2, 1)).astype(jnp.bfloat16)
    x_pad = jnp.pad(x_nlc, ((0, 0), (padding, padding), (0, 0)))
    lp = length + 2 * padding
    lout = (lp - dilation * (k - 1) - 1) // stride + 1

    # im2col: K statically-shifted slices, tap-major / cin-minor -> (M, K*Cin).
    taps = []
    for t in range(k):
        start = t * dilation
        stop = start + (lout - 1) * stride + 1
        taps.append(x_pad[:, start:stop:stride, :])          # (N, Lout, Cin)
    x_cols = taps[0] if k == 1 else jnp.concatenate(taps, axis=-1)
    m = n * lout
    kc = k * cin
    x_cols = x_cols.reshape(m, kc)

    # Weight: (Cout, Cin, K) -> (K, Cin, Cout) -> (K*Cin, Cout), bf16.
    w_mat = jnp.transpose(weight, (2, 1, 0)).reshape(kc, cout)
    w_mat = w_mat.astype(jnp.bfloat16)

    # ---- padding / tiling ----------------------------------------------
    # Cout padded to a multiple of 128 (lane-dense stores; padded channels
    # have gamma=beta=0 and produce exact zeros, sliced off afterwards).
    cout_p = max(128, ((cout + 127) // 128) * 128)
    pad_c = cout_p - cout
    tile_c = 256 if cout_p % 256 == 0 else 128

    # M tiled into the grid; padded rows are zero and add nothing to stats.
    tile_m = 512
    if m < tile_m:
        tile_m = ((m + 7) // 8) * 8
    m_p = ((m + tile_m - 1) // tile_m) * tile_m
    pad_m = m_p - m

    x_cols = jnp.pad(x_cols, ((0, pad_m), (0, 0)))
    w_mat = jnp.pad(w_mat, ((0, 0), (0, pad_c)))
    gamma2 = jnp.pad(gamma.astype(jnp.float32).reshape(1, cout),
                     ((0, 0), (0, pad_c)))
    beta2 = jnp.pad(beta.astype(jnp.float32).reshape(1, cout),
                    ((0, 0), (0, pad_c)))

    grid = (cout_p // tile_c, m_p // tile_m)     # Cout outer, M inner

    # Scoped-VMEM budget from the actual block sizes (+ headroom), <= 64 MiB
    # so it is valid on every generation (v7x has 64 MiB per TensorCore).
    blk_bytes = (2 * tile_m * kc * 2            # x_cols block, bf16, 2x buf
                 + 2 * kc * tile_c * 2          # weight block, bf16, 2x buf
                 + 2 * tile_m * tile_c * 4      # y output block, f32, 2x buf
                 + 32 * tile_c * 4)             # gamma/beta/a/b + scratch
    vmem_limit = min(64 << 20, blk_bytes + (16 << 20))

    cost1 = pl.CostEstimate(
        flops=2 * m_p * kc * cout_p,
        transcendentals=0,
        bytes_accessed=(grid[0] * m_p * kc * 2 + kc * cout_p * 2
                        + m_p * cout_p * 4))

    kernel1 = functools.partial(_conv_relu_stats_kernel, m_true=m)
    y_full, a_vec, b_vec = pl.pallas_call(
        kernel1,
        out_shape=(jax.ShapeDtypeStruct((m_p, cout_p), jnp.float32),
                   jax.ShapeDtypeStruct((1, cout_p), jnp.float32),
                   jax.ShapeDtypeStruct((1, cout_p), jnp.float32)),
        grid=grid,
        in_specs=[
            pl.BlockSpec((tile_m, kc), lambda j, i: (i, 0)),
            pl.BlockSpec((kc, tile_c), lambda j, i: (0, j)),
            pl.BlockSpec((1, tile_c), lambda j, i: (0, j)),
            pl.BlockSpec((1, tile_c), lambda j, i: (0, j)),
        ],
        out_specs=(
            pl.BlockSpec((tile_m, tile_c), lambda j, i: (i, j)),
            pl.BlockSpec((1, tile_c), lambda j, i: (0, j)),
            pl.BlockSpec((1, tile_c), lambda j, i: (0, j)),
        ),
        scratch_shapes=[pltpu.VMEM((1, tile_c), jnp.float32),
                        pltpu.VMEM((1, tile_c), jnp.float32)],
        compiler_params=pltpu.CompilerParams(
            dimension_semantics=("parallel", "arbitrary"),
            vmem_limit_bytes=vmem_limit),
        cost_estimate=cost1,
    )(x_cols, w_mat, gamma2, beta2)

    out_itemsize = jnp.dtype(x_ncl.dtype).itemsize
    cost2 = pl.CostEstimate(
        flops=2 * m_p * cout_p,
        transcendentals=0,
        bytes_accessed=m_p * cout_p * (4 + out_itemsize) + 2 * cout_p * 4)

    out2d = pl.pallas_call(
        _bn_apply_kernel,
        out_shape=jax.ShapeDtypeStruct((m_p, cout_p), x_ncl.dtype),
        grid=grid,
        in_specs=[
            pl.BlockSpec((tile_m, tile_c), lambda j, i: (i, j)),
            pl.BlockSpec((1, tile_c), lambda j, i: (0, j)),
            pl.BlockSpec((1, tile_c), lambda j, i: (0, j)),
        ],
        out_specs=pl.BlockSpec((tile_m, tile_c), lambda j, i: (i, j)),
        compiler_params=pltpu.CompilerParams(
            dimension_semantics=("parallel", "parallel"),
            vmem_limit_bytes=vmem_limit),
        cost_estimate=cost2,
    )(y_full, a_vec, b_vec)

    out_nlc = out2d[:m, :cout].reshape(n, lout, cout)
    return jnp.transpose(out_nlc, (0, 2, 1))                 # NLC -> NCL


def _reference(x_ncl, weight, gamma, beta, padding, quantize_bf16=False):
    """Pure-JAX reference matching the PyTorch forward (training-mode BN).

    With quantize_bf16=True the conv operands are rounded to bf16 first,
    matching the kernel's MXU input precision (structural-correctness check).
    """
    x = x_ncl
    w = weight
    if quantize_bf16:
        x = x.astype(jnp.bfloat16).astype(jnp.float32)
        w = w.astype(jnp.bfloat16).astype(jnp.float32)
    y = jax.lax.conv_general_dilated(
        x, w, window_strides=(1,), padding=[(padding, padding)],
        dimension_numbers=("NCH", "OIH", "NCH"))
    y = jnp.maximum(y, 0.0)
    mean = jnp.mean(y, axis=(0, 2), keepdims=True)
    var = jnp.mean((y - mean) ** 2, axis=(0, 2), keepdims=True)
    return ((y - mean) / jnp.sqrt(var + BN_EPS)
            * gamma.reshape(1, -1, 1) + beta.reshape(1, -1, 1))


if __name__ == "__main__":
    # Small shapes consistent with Conv1dReluBn(in_channels=4, out_channels=8,
    # kernel_size=3, padding=1, bias=False) applied to x of shape (N, Cin, L).
    N, CIN, COUT, L, K, PAD = 2, 4, 8, 16, 3, 1

    key = jax.random.PRNGKey(0)
    kx, kw, kg, kb = jax.random.split(key, 4)
    x = jax.random.normal(kx, (N, CIN, L), dtype=jnp.float32)
    weight = jax.random.normal(kw, (COUT, CIN, K), dtype=jnp.float32) * 0.1
    gamma = 1.0 + 0.1 * jax.random.normal(kg, (COUT,), dtype=jnp.float32)
    beta = 0.1 * jax.random.normal(kb, (COUT,), dtype=jnp.float32)

    out = conv1d_relu_bn(x, weight, gamma, beta, padding=PAD)
    out = jax.block_until_ready(out)
    assert out.shape == (N, COUT, L), out.shape

    # Structural correctness: reference with bf16-rounded conv operands
    # (isolates im2col / tiling / BN math from MXU input quantization).
    ref_q = _reference(x, weight, gamma, beta, PAD, quantize_bf16=True)
    assert jnp.allclose(out, ref_q, atol=2e-3, rtol=2e-3), float(
        jnp.max(jnp.abs(out - ref_q)))

    # End-to-end vs the pure f32 PyTorch-equivalent forward; tolerance sized
    # for bf16 MXU operands.
    ref = _reference(x, weight, gamma, beta, PAD)
    assert jnp.allclose(out, ref, atol=5e-2, rtol=5e-2), float(
        jnp.max(jnp.abs(out - ref)))

    # TODO(synk): PyTorch training-mode BatchNorm1d also updates
    # running_mean/running_var buffers; this forward-only kernel does not.
    print("KERNEL_OK")
</pallas_src>

<mosaic_0001>
module attributes {stable_mosaic.version = 11 : i64} {
  func.func @_bn_apply_kernel(%arg0: i32, %arg1: i32, %arg2: memref<32x128xf32, #tpu.memory_space<vmem>>, %arg3: memref<1x128xf32, #tpu.memory_space<vmem>>, %arg4: memref<1x128xf32, #tpu.memory_space<vmem>>, %arg5: memref<32x128xf32, #tpu.memory_space<vmem>>) attributes {dimension_semantics = [#tpu.dimension_semantics<parallel>, #tpu.dimension_semantics<parallel>], iteration_bounds = array<i64: 1, 1>, scalar_prefetch = 0 : i64, scratch_operands = 0 : i64, tpu.core_type = #tpu.core_type<tc>, window_params = [{transform_indices = @transform_0, window_bounds = array<i64: 32, 128>}, {transform_indices = @transform_1, window_bounds = array<i64: 1, 128>}, {transform_indices = @transform_2, window_bounds = array<i64: 1, 128>}, {transform_indices = @transform_3, window_bounds = array<i64: 32, 128>}]} {
    %c0 = arith.constant 0 : index
    %c0_0 = arith.constant 0 : index
    %0 = vector.load %arg2[%c0, %c0_0] : memref<32x128xf32, #tpu.memory_space<vmem>>, vector<32x128xf32>
    %c0_1 = arith.constant 0 : index
    %c0_2 = arith.constant 0 : index
    %1 = vector.load %arg3[%c0_1, %c0_2] : memref<1x128xf32, #tpu.memory_space<vmem>>, vector<1x128xf32>
    %2 = vector.broadcast %1 : vector<1x128xf32> to vector<32x128xf32>
    %3 = arith.mulf %0, %2 : vector<32x128xf32>
    %c0_3 = arith.constant 0 : index
    %c0_4 = arith.constant 0 : index
    %4 = vector.load %arg4[%c0_3, %c0_4] : memref<1x128xf32, #tpu.memory_space<vmem>>, vector<1x128xf32>
    %5 = vector.broadcast %4 : vector<1x128xf32> to vector<32x128xf32>
    %6 = arith.addf %3, %5 : vector<32x128xf32>
    %c0_5 = arith.constant 0 : index
    %c0_6 = arith.constant 0 : index
    %7 = vector.load %arg5[%c0_5, %c0_6] : memref<32x128xf32, #tpu.memory_space<vmem>>, vector<32x128xf32>
    tpu.vector_store %arg5[%c0_5, %c0_6], %6 {strides = array<i32>} : memref<32x128xf32, #tpu.memory_space<vmem>>, vector<32x128xf32>,
    return
  }
  func.func @transform_0(%arg0: i32, %arg1: i32) -> (i32, i32) {
    %c0_i32 = arith.constant 0 : i32
    return %arg1, %arg0 : i32, i32
  }
  func.func @transform_1(%arg0: i32, %arg1: i32) -> (i32, i32) {
    %c0_i32 = arith.constant 0 : i32
    %c0_i32_0 = arith.constant 0 : i32
    return %c0_i32, %arg0 : i32, i32
  }
  func.func @transform_2(%arg0: i32, %arg1: i32) -> (i32, i32) {
    %c0_i32 = arith.constant 0 : i32
    %c0_i32_0 = arith.constant 0 : i32
    return %c0_i32, %arg0 : i32, i32
  }
  func.func @transform_3(%arg0: i32, %arg1: i32) -> (i32, i32) {
    %c0_i32 = arith.constant 0 : i32
    return %arg1, %arg0 : i32, i32
  }
}

module attributes {stable_mosaic.version = 11 : i64} {
  func.func @_conv_relu_stats_kernel(%arg0: i32, %arg1: i32, %arg2: memref<32x12xbf16, #tpu.memory_space<vmem>>, %arg3: memref<12x128xbf16, #tpu.memory_space<vmem>>, %arg4: memref<1x128xf32, #tpu.memory_space<vmem>>, %arg5: memref<1x128xf32, #tpu.memory_space<vmem>>, %arg6: memref<32x128xf32, #tpu.memory_space<vmem>>, %arg7: memref<1x128xf32, #tpu.memory_space<vmem>>, %arg8: memref<1x128xf32, #tpu.memory_space<vmem>>, %arg9: memref<1x128xf32, #tpu.memory_space<vmem>>, %arg10: memref<1x128xf32, #tpu.memory_space<vmem>>) attributes {dimension_semantics = [#tpu.dimension_semantics<parallel>, #tpu.dimension_semantics<arbitrary>], iteration_bounds = array<i64: 1, 1>, scalar_prefetch = 0 : i64, scratch_operands = 2 : i64, tpu.core_type = #tpu.core_type<tc>, window_params = [{transform_indices = @transform_0, window_bounds = array<i64: 32, 12>}, {transform_indices = @transform_1, window_bounds = array<i64: 12, 128>}, {transform_indices = @transform_2, window_bounds = array<i64: 1, 128>}, {transform_indices = @transform_3, window_bounds = array<i64: 1, 128>}, {transform_indices = @transform_4, window_bounds = array<i64: 32, 128>}, {transform_indices = @transform_5, window_bounds = array<i64: 1, 128>}, {transform_indices = @transform_6, window_bounds = array<i64: 1, 128>}]} {
    %c0_i32 = arith.constant 0 : i32
    %0 = arith.cmpi eq, %arg1, %c0_i32 : i32
    %1 = arith.extui %0 : i1 to i32
    %c0_i32_0 = arith.constant 0 : i32
    %2 = arith.cmpi ne, %1, %c0_i32_0 : i32
    scf.if %2 {
      %cst_19 = arith.constant 0.000000e+00 : f32
      %23 = vector.broadcast %cst_19 : f32 to vector<1x128xf32>
      %c0_20 = arith.constant 0 : index
      %c0_21 = arith.constant 0 : index
      %24 = vector.load %arg9[%c0_20, %c0_21] : memref<1x128xf32, #tpu.memory_space<vmem>>, vector<1x128xf32>
      tpu.vector_store %arg9[%c0_20, %c0_21], %23 {strides = array<i32>} : memref<1x128xf32, #tpu.memory_space<vmem>>, vector<1x128xf32>,
      %cst_22 = arith.constant 0.000000e+00 : f32
      %25 = vector.broadcast %cst_22 : f32 to vector<1x128xf32>
      %c0_23 = arith.constant 0 : index
      %c0_24 = arith.constant 0 : index
      %26 = vector.load %arg10[%c0_23, %c0_24] : memref<1x128xf32, #tpu.memory_space<vmem>>, vector<1x128xf32>
      tpu.vector_store %arg10[%c0_23, %c0_24], %25 {strides = array<i32>} : memref<1x128xf32, #tpu.memory_space<vmem>>, vector<1x128xf32>,
    } else {
    }
    %c0 = arith.constant 0 : index
    %c0_1 = arith.constant 0 : index
    %3 = vector.load %arg2[%c0, %c0_1] : memref<32x12xbf16, #tpu.memory_space<vmem>>, vector<32x12xbf16>
    %c0_2 = arith.constant 0 : index
    %c0_3 = arith.constant 0 : index
    %4 = vector.load %arg3[%c0_2, %c0_3] : memref<12x128xbf16, #tpu.memory_space<vmem>>, vector<12x128xbf16>
    %cst = arith.constant dense<0.000000e+00> : vector<32x128xf32>
    %5 = tpu.matmul %3, %4, %cst {dimension_numbers = #tpu.dot_dimension_numbers<[1], [0], [0], [1], [0, 0, 1, 1], [], []>} : vector<32x12xbf16>, vector<12x128xbf16>, vector<32x128xf32> -> vector<32x128xf32>
    %cst_4 = arith.constant 0.000000e+00 : f32
    %6 = vector.broadcast %cst_4 : f32 to vector<32x128xf32>
    %7 = arith.maximumf %5, %6 : vector<32x128xf32>
    %c0_5 = arith.constant 0 : index
    %c0_6 = arith.constant 0 : index
    %8 = vector.load %arg6[%c0_5, %c0_6] : memref<32x128xf32, #tpu.memory_space<vmem>>, vector<32x128xf32>
    tpu.vector_store %arg6[%c0_5, %c0_6], %7 {strides = array<i32>} : memref<32x128xf32, #tpu.memory_space<vmem>>, vector<32x128xf32>,
    %c0_7 = arith.constant 0 : index
    %c0_8 = arith.constant 0 : index
    %9 = vector.load %arg9[%c0_7, %c0_8] : memref<1x128xf32, #tpu.memory_space<vmem>>, vector<1x128xf32>
    %cst_9 = arith.constant dense<0.000000e+00> : vector<128xf32>
    %10 = vector.multi_reduction <add>, %7, %cst_9 [0] : vector<32x128xf32> to vector<128xf32>
    %11 = vector.shape_cast %10 : vector<128xf32> to vector<1x128xf32>
    %12 = arith.addf %9, %11 : vector<1x128xf32>
    %c0_10 = arith.constant 0 : index
    %c0_11 = arith.constant 0 : index
    %13 = vector.load %arg9[%c0_10, %c0_11] : memref<1x128xf32, #tpu.memory_space<vmem>>, vector<1x128xf32>
    tpu.vector_store %arg9[%c0_10, %c0_11], %12 {strides = array<i32>} : memref<1x128xf32, #tpu.memory_space<vmem>>, vector<1x128xf32>,
    %c0_12 = arith.constant 0 : index
    %c0_13 = arith.constant 0 : index
    %14 = vector.load %arg10[%c0_12, %c0_13] : memref<1x128xf32, #tpu.memory_space<vmem>>, vector<1x128xf32>
    %15 = arith.mulf %7, %7 : vector<32x128xf32>
    %cst_14 = arith.constant dense<0.000000e+00> : vector<128xf32>
    %16 = vector.multi_reduction <add>, %15, %cst_14 [0] : vector<32x128xf32> to vector<128xf32>
    %17 = vector.shape_cast %16 : vector<128xf32> to vector<1x128xf32>
    %18 = arith.addf %14, %17 : vector<1x128xf32>
    %c0_15 = arith.constant 0 : index
    %c0_16 = arith.constant 0 : index
    %19 = vector.load %arg10[%c0_15, %c0_16] : memref<1x128xf32, #tpu.memory_space<vmem>>, vector<1x128xf32>
    tpu.vector_store %arg10[%c0_15, %c0_16], %18 {strides = array<i32>} : memref<1x128xf32, #tpu.memory_space<vmem>>, vector<1x128xf32>,
    %c0_i32_17 = arith.constant 0 : i32
    %20 = arith.cmpi eq, %arg1, %c0_i32_17 : i32
    %21 = arith.extui %20 : i1 to i32
    %c0_i32_18 = arith.constant 0 : i32
    %22 = arith.cmpi ne, %21, %c0_i32_18 : i32
    scf.if %22 {
      %c0_19 = arith.constant 0 : index
      %c0_20 = arith.constant 0 : index
      %23 = vector.load %arg9[%c0_19, %c0_20] : memref<1x128xf32, #tpu.memory_space<vmem>>, vector<1x128xf32>
      %cst_21 = arith.constant 3.125000e-02 : f32
      %24 = vector.broadcast %cst_21 : f32 to vector<1x128xf32>
      %25 = arith.mulf %23, %24 : vector<1x128xf32>
      %c0_22 = arith.constant 0 : index
      %c0_23 = arith.constant 0 : index
      %26 = vector.load %arg10[%c0_22, %c0_23] : memref<1x128xf32, #tpu.memory_space<vmem>>, vector<1x128xf32>
      %cst_24 = arith.constant 3.125000e-02 : f32
      %27 = vector.broadcast %cst_24 : f32 to vector<1x128xf32>
      %28 = arith.mulf %26, %27 : vector<1x128xf32>
      %29 = arith.mulf %25, %25 : vector<1x128xf32>
      %30 = arith.subf %28, %29 : vector<1x128xf32>
      %cst_25 = arith.constant 0.000000e+00 : f32
      %31 = vector.broadcast %cst_25 : f32 to vector<1x128xf32>
      %32 = arith.maximumf %30, %31 : vector<1x128xf32>
      %c0_26 = arith.constant 0 : index
      %c0_27 = arith.constant 0 : index
      %33 = vector.load %arg4[%c0_26, %c0_27] : memref<1x128xf32, #tpu.memory_space<vmem>>, vector<1x128xf32>
      %cst_28 = arith.constant 9.99999974E-6 : f32
      %34 = vector.broadcast %cst_28 : f32 to vector<1x128xf32>
      %35 = arith.addf %32, %34 : vector<1x128xf32>
      %36 = math.rsqrt %35 : vector<1x128xf32>
      %37 = arith.mulf %33, %36 : vector<1x128xf32>
      %c0_29 = arith.constant 0 : index
      %c0_30 = arith.constant 0 : index
      %38 = vector.load %arg7[%c0_29, %c0_30] : memref<1x128xf32, #tpu.memory_space<vmem>>, vector<1x128xf32>
      tpu.vector_store %arg7[%c0_29, %c0_30], %37 {strides = array<i32>} : memref<1x128xf32, #tpu.memory_space<vmem>>, vector<1x128xf32>,
      %c0_31 = arith.constant 0 : index
      %c0_32 = arith.constant 0 : index
      %39 = vector.load %arg5[%c0_31, %c0_32] : memref<1x128xf32, #tpu.memory_space<vmem>>, vector<1x128xf32>
      %40 = arith.mulf %25, %37 : vector<1x128xf32>
      %41 = arith.subf %39, %40 : vector<1x128xf32>
      %c0_33 = arith.constant 0 : index
      %c0_34 = arith.constant 0 : index
      %42 = vector.load %arg8[%c0_33, %c0_34] : memref<1x128xf32, #tpu.memory_space<vmem>>, vector<1x128xf32>
      tpu.vector_store %arg8[%c0_33, %c0_34], %41 {strides = array<i32>} : memref<1x128xf32, #tpu.memory_space<vmem>>, vector<1x128xf32>,
    } else {
    }
    return
  }
  func.func @transform_0(%arg0: i32, %arg1: i32) -> (i32, i32) {
    %c0_i32 = arith.constant 0 : i32
    %c0_i32_0 = arith.constant 0 : i32
    return %arg1, %c0_i32 : i32, i32
  }
  func.func @transform_1(%arg0: i32, %arg1: i32) -> (i32, i32) {
    %c0_i32 = arith.constant 0 : i32
    %c0_i32_0 = arith.constant 0 : i32
    return %c0_i32, %arg0 : i32, i32
  }
  func.func @transform_2(%arg0: i32, %arg1: i32) -> (i32, i32) {
    %c0_i32 = arith.constant 0 : i32
    %c0_i32_0 = arith.constant 0 : i32
    return %c0_i32, %arg0 : i32, i32
  }
  func.func @transform_3(%arg0: i32, %arg1: i32) -> (i32, i32) {
    %c0_i32 = arith.constant 0 : i32
    %c0_i32_0 = arith.constant 0 : i32
    return %c0_i32, %arg0 : i32, i32
  }
  func.func @transform_4(%arg0: i32, %arg1: i32) -> (i32, i32) {
    %c0_i32 = arith.constant 0 : i32
    return %arg1, %arg0 : i32, i32
  }
  func.func @transform_5(%arg0: i32, %arg1: i32) -> (i32, i32) {
    %c0_i32 = arith.constant 0 : i32
    %c0_i32_0 = arith.constant 0 : i32
    return %c0_i32, %arg0 : i32, i32
  }
  func.func @transform_6(%arg0: i32, %arg1: i32) -> (i32, i32) {
    %c0_i32 = arith.constant 0 : i32
    %c0_i32_0 = arith.constant 0 : i32
    return %c0_i32, %arg0 : i32, i32
  }
}

</mosaic_0001>

<llo_original>
// kernel: conv1d_relu_bn.3
$region0: #{conv1d_relu_bn.3}
  #allocation0 [shape = 'u32[]', space=smem, size = 0x4, offset = 0x4, fixed_abs, tag = 'smem constant byte address 0x4 - core index']
  #allocation1 [shape = 'u32[144,128]{1,0:T(1,128)}', space=vmem, size = 0x12000, scoped, tag = 'internal scratch']
  %s0 = inlined_call_operand.vmem [shape: f32[32,128], index: 0, kind: input, shape index: {}]
  %s1 = inlined_call_operand.vmem [shape: f32[1,128], index: 1, kind: input, shape index: {}]
  %s2 = inlined_call_operand.vmem [shape: f32[1,128], index: 2, kind: input, shape index: {}]
  %s3 = inlined_call_operand.vmem [shape: f32[32,128], index: 3, kind: output, shape index: {}]
  %s4 = sld [smem:[#allocation0]]
  $region22: #{conv1d_relu_bn.3} parent=0
    _
  %s6 = ssub.s32 1, %s4
  %s7 = scalar_select 0, %s6, %s4
  // Predicated region
  $region2: #{conv1d_relu_bn.3} parent=0 // pred_check
    _
  $region3: #{conv1d_relu_bn.3} parent=0 // pred_check_branch
    %9 = sbr.rel (0) target = $region5
  $region4: #{conv1d_relu_bn.3} parent=0 // pred_region
    _
  $region5: #{conv1d_relu_bn.3} parent=0 // pred_fallthru
    _
  // Predicated region
  $region6: #{conv1d_relu_bn.3} parent=0 // pred_check
    _
  $region7: #{conv1d_relu_bn.3} parent=0 // pred_check_branch
    %11 = sbr.rel (0) target = $region9
  $region8: #{conv1d_relu_bn.3} parent=0 // pred_region
    _
  $region9: #{conv1d_relu_bn.3} parent=0 // pred_fallthru
    _
  // Predicated region
  $region10: #{conv1d_relu_bn.3} parent=0 // pred_check
    _
  $region11: #{conv1d_relu_bn.3} parent=0 // pred_check_branch
    %13 = sbr.rel (0) target = $region13
  $region12: #{conv1d_relu_bn.3} parent=0 // pred_region
    _
  $region13: #{conv1d_relu_bn.3} parent=0 // pred_fallthru
    _
  %v14 = vld [vmem:[%s0] sm:$0xff]
  %v15 = vld [vmem:[%s0 + $0x8] sm:$0xff]
  %v16 = vld [vmem:[%s0 + $0x10] sm:$0xff]
  %v17 = vld [vmem:[%s0 + $0x18] sm:$0xff]
  %v18 = vld [vmem:[%s1] sm:$0x1]
  %v20 = vlaneseq
  %v21 = vshrl.u32 %v20, 7
  %v22 = vsub.s32 0, %v21
  %v23 = vrot.slane %v18, %v22
  %v25 = vmul.f32 %v14, %v23
  %v26 = vmul.f32 %v15, %v23
  %v27 = vmul.f32 %v16, %v23
  %v28 = vmul.f32 %v17, %v23
  %v29 = vld [vmem:[%s2] sm:$0x1]
  %v31 = vlaneseq
  %v32 = vshrl.u32 %v31, 7
  %v33 = vsub.s32 0, %v32
  %v34 = vrot.slane %v29, %v33
  %v36 = vadd.f32 %v25, %v34
  %v37 = vadd.f32 %v26, %v34
  %v38 = vadd.f32 %v27, %v34
  %v39 = vadd.f32 %v28, %v34
  %40 = vst [vmem:[%s3] sm:$0xff] %v36
  %41 = vst [vmem:[%s3 + $0x8] sm:$0xff] %v37
  %42 = vst [vmem:[%s3 + $0x10] sm:$0xff] %v38
  %43 = vst [vmem:[%s3 + $0x18] sm:$0xff] %v39
  // Predicated region
  $region14: #{conv1d_relu_bn.3} parent=0 // pred_check
    _
  $region15: #{conv1d_relu_bn.3} parent=0 // pred_check_branch
    %45 = sbr.rel (0) target = $region17
  $region16: #{conv1d_relu_bn.3} parent=0 // pred_region
    _
  $region17: #{conv1d_relu_bn.3} parent=0 // pred_fallthru
    _
  // Predicated region
  $region18: #{conv1d_relu_bn.3} parent=0 // pred_check
    _
  $region19: #{conv1d_relu_bn.3} parent=0 // pred_check_branch
    %47 = sbr.rel (0) target = $region21
  $region20: #{conv1d_relu_bn.3} parent=0 // pred_region
    _
  $region21: #{conv1d_relu_bn.3} parent=0 // pred_fallthru
    _

// kernel: conv1d_relu_bn.2
$region0: #{conv1d_relu_bn.2}
  #allocation0 [shape = 'u32[]', space=smem, size = 0x4, offset = 0x4, fixed_abs, tag = 'smem constant byte address 0x4 - core index']
  #allocation1 [shape = 'u32[144,128]{1,0:T(1,128)}', space=vmem, size = 0x12000, scoped, tag = 'internal scratch']
  #allocation2 [shape = 'f32[1,128]{1,0:T(1,128)}', space=vmem, size = 0x200, scoped, tag = 'scratch operand']
  #allocation3 [shape = 'f32[1,128]{1,0:T(1,128)}', space=vmem, size = 0x200, scoped, tag = 'scratch operand']
  %s0 = inlined_call_operand.vmem [shape: bf16[32,12], index: 0, kind: input, shape index: {}]
  %s1 = inlined_call_operand.vmem [shape: bf16[12,128], index: 1, kind: input, shape index: {}]
  %s2 = inlined_call_operand.vmem [shape: f32[1,128], index: 2, kind: input, shape index: {}]
  %s3 = inlined_call_operand.vmem [shape: f32[1,128], index: 3, kind: input, shape index: {}]
  %s4 = inlined_call_operand.vmem [shape: f32[32,128], index: 4, kind: output, shape index: {0}]
  %s5 = inlined_call_operand.vmem [shape: f32[1,128], index: 5, kind: output, shape index: {1}]
  %s6 = inlined_call_operand.vmem [shape: f32[1,128], index: 6, kind: output, shape index: {2}]
  %7 = xla_tuple %s4, %s5, %s6
  %s8 = sld [smem:[#allocation0]]
  $region50: #{conv1d_relu_bn.2} parent=0
    _
  %s10 = ssub.s32 1, %s8
  %s11 = scalar_select 0, %s10, %s8
  // Predicated region
  $region2: #{conv1d_relu_bn.2} parent=0 // pred_check
    _
  $region3: #{conv1d_relu_bn.2} parent=0 // pred_check_branch
    %13 = sbr.rel (0) target = $region5
  $region4: #{conv1d_relu_bn.2} parent=0 // pred_region
    _
  $region5: #{conv1d_relu_bn.2} parent=0 // pred_fallthru
    _
  // Predicated region
  $region6: #{conv1d_relu_bn.2} parent=0 // pred_check
    _
  $region7: #{conv1d_relu_bn.2} parent=0 // pred_check_branch
    %15 = sbr.rel (0) target = $region9
  $region8: #{conv1d_relu_bn.2} parent=0 // pred_region
    _
  $region9: #{conv1d_relu_bn.2} parent=0 // pred_fallthru
    _
  // Predicated region
  $region10: #{conv1d_relu_bn.2} parent=0 // pred_check
    _
  $region11: #{conv1d_relu_bn.2} parent=0 // pred_check_branch
    %17 = sbr.rel (0) target = $region13
  $region12: #{conv1d_relu_bn.2} parent=0 // pred_region
    _
  $region13: #{conv1d_relu_bn.2} parent=0 // pred_fallthru
    _
  // Predicated region
  $region14: #{conv1d_relu_bn.2} parent=0 // pred_check
    _
  $region15: #{conv1d_relu_bn.2} parent=0 // pred_check_branch
    %19 = sbr.rel (0) target = $region17
  $region16: #{conv1d_relu_bn.2} parent=0 // pred_region
    _
  $region17: #{conv1d_relu_bn.2} parent=0 // pred_fallthru
    _
  %p21 = scmp.eq.s32.totalorder 0, 0
  // Predicated region
  $region18: #{conv1d_relu_bn.2} parent=0 // pred_check
    %p22 = pneg %p21
  $region19: #{conv1d_relu_bn.2} parent=0 // pred_check_branch
    %24 = sbr.rel (%p22) target = $region21
  $region20: #{conv1d_relu_bn.2} parent=0 // pred_region
    %25 = vst [vmem:[#allocation2] sm:$0x1] 0.0
    %26 = vst [vmem:[#allocation3] sm:$0x1] 0.0
  $region21: #{conv1d_relu_bn.2} parent=0 // pred_fallthru
    _
  %v27 = vld [vmem:[%s0] sm:$0xf]
  %v28 = vld [vmem:[%s0 + $0x4] sm:$0xf]
  %v29 = vld [vmem:[%s0 + $0x8] sm:$0xf]
  %v30 = vld [vmem:[%s0 + $0xc] sm:$0xf]
  %v31 = vld [vmem:[%s1] sm:$0xf]
  %v32 = vld [vmem:[%s1 + $0x4] sm:$0x3]
  %v37 = vunpack.c.l.b16 %v27
  %v38 = vunpack.c.l.b16 %v28
  %v39 = vunpack.c.l.b16 %v29
  %v40 = vunpack.c.l.b16 %v30
  %v41 = vpack.c.b16 %v38, %v37
  %v42 = vpack.c.b16 %v40, %v39
  %v45 = vunpack.c.l.b16 %v31
  %v46 = vunpack.c.l.b16 %v32
  %v47 = vpack.c.b16 %v46, %v45
  %vm48 = vcmask 97280
  %v50 = vsel %vm48, %v41, 0
  %v53 = vsel %vm48, %v42, 0
  %vm55 = vcmask 1045504
  %v57 = vsel %vm55, %v47, 0
  %59 = vmatprep.subr.bf16.mxu0 0
  %60 = vmatpush1.bf16.msra.mxu0 %v57
  %61 = vmatprep.subr.bf16.mxu0 0
  %62 = vmatpush1.bf16.msra.mxu0 0
  %63 = vmatprep.subr.bf16.mxu0 0
  %64 = vmatpush1.bf16.msra.mxu0 0
  %65 = vmatprep.subr.bf16.mxu0 0
  %66 = vmatpush1.bf16.msra.mxu0 0
  %67 = vmatprep.subr.bf16.mxu0 0
  %68 = vmatpush1.bf16.msra.mxu0 0
  %69 = vmatprep.subr.bf16.mxu0 0
  %70 = vmatpush1.bf16.msra.mxu0 0
  %71 = vmatprep.subr.bf16.mxu0 0
  %72 = vmatpush1.bf16.msra.mxu0 0
  %73 = vmatprep.subr.bf16.mxu0 0
  %74 = vmatpush1.bf16.msra.mxu0 0
  %75 = vmatprep.subr.bf16.mxu0 0
  %76 = vmatpush1.bf16.msra.mxu0 0
  %77 = vmatprep.subr.bf16.mxu0 0
  %78 = vmatpush1.bf16.msra.mxu0 0
  %79 = vmatprep.subr.bf16.mxu0 0
  %80 = vmatpush1.bf16.msra.mxu0 0
  %81 = vmatprep.subr.bf16.mxu0 0
  %82 = vmatpush1.bf16.msra.mxu0 0
  %83 = vmatprep.subr.bf16.mxu0 0
  %84 = vmatpush1.bf16.msra.mxu0 0
  %85 = vmatprep.subr.bf16.mxu0 0
  %86 = vmatpush1.bf16.msra.mxu0 0
  %87 = vmatprep.subr.bf16.mxu0 0
  %88 = vmatpush1.bf16.msra.mxu0 0
  %89 = vmatprep.subr.bf16.mxu0 0
  %90 = vmatpush1.bf16.msra.mxu0 0
  %91 = vmatprep.mubr.bf16.mxu0 0
  %92 = vmatmul.mubr.bf16.gmra.mrb[0].mxu0 %v50
  %v93 = vpop.f32.mrb[0].mxu0
  %v94 = vadd.f32 0.0, %v93
  %v95 = vpop.f32.mrb[0].mxu0
  %v96 = vpop.f32.mrb[0].mxu0
  %v97 = vadd.f32 0.0, %v96
  %v98 = vpop.f32.mrb[0].mxu0
  %99 = vmatprep.mubr.bf16.mxu0 0
  %100 = vmatmul.mubr.bf16.gmra.mrb[0].mxu0 %v53
  %v101 = vpop.f32.mrb[0].mxu0
  %v102 = vadd.f32 0.0, %v101
  %v103 = vpop.f32.mrb[0].mxu0
  %v104 = vpop.f32.mrb[0].mxu0
  %v105 = vadd.f32 0.0, %v104
  %v106 = vpop.f32.mrb[0].mxu0
  %107 = vdwg.mxu0
  %v108 = vmax.f32 %v94, 0.0
  %v109 = vmax.f32 %v97, 0.0
  %v110 = vmax.f32 %v102, 0.0
  %v111 = vmax.f32 %v105, 0.0
  %112 = vst [vmem:[%s4] sm:$0xff] %v108
  %113 = vst [vmem:[%s4 + $0x8] sm:$0xff] %v109
  %114 = vst [vmem:[%s4 + $0x10] sm:$0xff] %v110
  %115 = vst [vmem:[%s4 + $0x18] sm:$0xff] %v111
  %v116 = vld [vmem:[#allocation2] sm:$0x1]
  %v117 = vadd.f32 %v108, %v109
  %v118 = vadd.f32 %v117, %v110
  %v119 = vadd.f32 %v118, %v111
  %v120 = vrot.slane %v119, 4
  %v121 = vadd.f32 %v119, %v120
  %v122 = vrot.slane %v121, 2
  %v123 = vadd.f32 %v121, %v122
  %v124 = vrot.slane %v123, 1
  %v125 = vadd.f32 %v123, %v124
  %v126 = vadd.f32 %v116, %v125
  %127 = vst [vmem:[#allocation2] sm:$0x1] %v126
  %v128 = vld [vmem:[#allocation3] sm:$0x1]
  %v129 = vmul.f32 %v108, %v108
  %v130 = vmul.f32 %v109, %v109
  %v131 = vmul.f32 %v110, %v110
  %v132 = vmul.f32 %v111, %v111
  %v133 = vadd.f32 %v129, %v130
  %v134 = vadd.f32 %v133, %v131
  %v135 = vadd.f32 %v134, %v132
  %v136 = vrot.slane %v135, 4
  %v137 = vadd.f32 %v135, %v136
  %v138 = vrot.slane %v137, 2
  %v139 = vadd.f32 %v137, %v138
  %v140 = vrot.slane %v139, 1
  %v141 = vadd.f32 %v139, %v140
  %v142 = vadd.f32 %v128, %v141
  %143 = vst [vmem:[#allocation3] sm:$0x1] %v142
  // Predicated region
  $region22: #{conv1d_relu_bn.2} parent=0 // pred_check
    %p144 = pneg %p21
  $region23: #{conv1d_relu_bn.2} parent=0 // pred_check_branch
    %146 = sbr.rel (%p144) target = $region25
  $region24: #{conv1d_relu_bn.2} parent=0 // pred_region
    %v147 = vld [vmem:[#allocation2] sm:$0x1]
    %v148 = vmul.f32 %v147, 0.03125
    %v149 = vld [vmem:[#allocation3] sm:$0x1]
    %v150 = vmul.f32 %v149, 0.03125
    %v151 = vmul.f32 %v148, %v148
    %v152 = vsub.f32 %v150, %v151
    %v153 = vmax.f32 %v152, 0.0
    %v154 = vld [vmem:[%s2] sm:$0x1]
    %v155 = vadd.f32 %v153, 1e-05
    %v156 = vrsqrt.pop %v155
    %v157 = vmul.f32 %v154, %v156
    %158 = vst [vmem:[%s5] sm:$0x1] %v157
    %v159 = vld [vmem:[%s3] sm:$0x1]
    %v160 = vmul.f32 %v148, %v157
    %v161 = vsub.f32 %v159, %v160
    %162 = vst [vmem:[%s6] sm:$0x1] %v161
  $region25: #{conv1d_relu_bn.2} parent=0 // pred_fallthru
    _
  // Predicated region
  $region26: #{conv1d_relu_bn.2} parent=0 // pred_check
    _
  $region27: #{conv1d_relu_bn.2} parent=0 // pred_check_branch
    %164 = sbr.rel (0) target = $region29
  $region28: #{conv1d_relu_bn.2} parent=0 // pred_region
    _
  $region29: #{conv1d_relu_bn.2} parent=0 // pred_fallthru
    _
  // Predicated region
  $region30: #{conv1d_relu_bn.2} parent=0 // pred_check
    _
  $region31: #{conv1d_relu_bn.2} parent=0 // pred_check_branch
    %166 = sbr.rel (0) target = $region33
  $region32: #{conv1d_relu_bn.2} parent=0 // pred_region
    _
  $region33: #{conv1d_relu_bn.2} parent=0 // pred_fallthru
    _
  // Predicated region
  $region34: #{conv1d_relu_bn.2} parent=0 // pred_check
    _
  $region35: #{conv1d_relu_bn.2} parent=0 // pred_check_branch
    %168 = sbr.rel (0) target = $region37
  $region36: #{conv1d_relu_bn.2} parent=0 // pred_region
    _
  $region37: #{conv1d_relu_bn.2} parent=0 // pred_fallthru
    _
  // Predicated region
  $region38: #{conv1d_relu_bn.2} parent=0 // pred_check
    _
  $region39: #{conv1d_relu_bn.2} parent=0 // pred_check_branch
    %170 = sbr.rel (0) target = $region41
  $region40: #{conv1d_relu_bn.2} parent=0 // pred_region
    _
  $region41: #{conv1d_relu_bn.2} parent=0 // pred_fallthru
    _
  // Predicated region
  $region42: #{conv1d_relu_bn.2} parent=0 // pred_check
    _
  $region43: #{conv1d_relu_bn.2} parent=0 // pred_check_branch
    %172 = sbr.rel (0) target = $region45
  $region44: #{conv1d_relu_bn.2} parent=0 // pred_region
    _
  $region45: #{conv1d_relu_bn.2} parent=0 // pred_fallthru
    _
  // Predicated region
  $region46: #{conv1d_relu_bn.2} parent=0 // pred_check
    _
  $region47: #{conv1d_relu_bn.2} parent=0 // pred_check_branch
    %174 = sbr.rel (0) target = $region49
  $region48: #{conv1d_relu_bn.2} parent=0 // pred_region
    _
  $region49: #{conv1d_relu_bn.2} parent=0 // pred_fallthru
    _

</llo_original>
